<compile_context>
chip_gen: v6e
topology: v6e:2x2x1
jax: 0.10.0
libtpu: 0.0.40
codegen_flags: <defaults>
</compile_context>

<pallas_src>
import functools
import math

import jax
import jax.numpy as jnp
from jax.experimental import pallas as pl
from jax.experimental.pallas import tpu as pltpu


# ----------------------------------------------------------------------------
# Kernel: one grid step == one block of b_blk batch elements.
# ----------------------------------------------------------------------------
def cross_attention_kernel(x_ref,        # (1, b_blk, Dtot)
                           w_qkv_ref,    # (Dtot, 9A)   block-diag fused weights
                           b_qkv_ref,    # (1, 9A)
                           w_rep_ref,    # (3A, 3*S*A)  replicated out_proj
                           b_rep_ref,    # (1, 3*S*A)
                           o_ref,        # (1, b_blk, 3*S*A)
                           *, attention_dim):
  A = attention_dim
  f32 = jnp.float32

  x = x_ref[0]                                                   # (b_blk, Dtot)

  # Fused modality-proj -> fc -> in_proj (query scale pre-folded in wrapper).
  y = jnp.dot(x, w_qkv_ref[...], preferred_element_type=f32) + b_qkv_ref[...]

  def seg(m, r):              # modality m in {0,1,2}, role r in {q=0,k=1,v=2}
    c = (m * 3 + r) * A
    return y[:, c:c + A]                                         # (b_blk, A)

  qs = [seg(m, 0) for m in range(3)]
  ks = [seg(m, 1) for m in range(3)]
  vs = [seg(m, 2) for m in range(3)]

  # Exact collapse of the (3S)x(3S) softmax to a 3x3 softmax (rows within a
  # modality block are identical, so the S replication factors cancel).
  ctx = []
  for i in range(3):
    s0 = jnp.sum(qs[i] * ks[0], axis=-1, keepdims=True)          # (b_blk, 1)
    s1 = jnp.sum(qs[i] * ks[1], axis=-1, keepdims=True)
    s2 = jnp.sum(qs[i] * ks[2], axis=-1, keepdims=True)
    m_i = jnp.maximum(jnp.maximum(s0, s1), s2)
    p0 = jnp.exp(s0 - m_i)
    p1 = jnp.exp(s1 - m_i)
    p2 = jnp.exp(s2 - m_i)
    inv = pl.reciprocal(p0 + p1 + p2, approx=True)
    ctx.append((p0 * inv) * vs[0] + (p1 * inv) * vs[1] + (p2 * inv) * vs[2])

  ctx_flat = jnp.concatenate(ctx, axis=-1)                       # (b_blk, 3A)

  # Fused out_proj + sequence replication: single lane-dense matmul + store.
  out = jnp.dot(ctx_flat, w_rep_ref[...],
                preferred_element_type=f32) + b_rep_ref[...]     # (b_blk, 3SA)
  o_ref[0] = out.astype(o_ref.dtype)


# ----------------------------------------------------------------------------
# Wrapper-side weight folding (one-time layout/algebra plumbing)
# ----------------------------------------------------------------------------
def fold_params(params, *, seq_len, attention_dim):
  A = attention_dim
  S = seq_len
  w_fc, b_fc = params["w_fc"], params["b_fc"][0]                 # (A,A), (A,)
  in_w, in_b = params["in_proj_w"], params["in_proj_b"][0]       # (3A,A), (3A,)
  out_w, out_b = params["out_w"], params["out_b"][0]             # (A,A), (A,)
  scale = 1.0 / math.sqrt(A)

  mods = [("w_text", "b_text"), ("w_image", "b_image"), ("w_time", "b_time")]
  dims = [params[w].shape[-1] for w, _ in mods]
  d_tot = sum(dims)

  w_qkv = jnp.zeros((d_tot, 9 * A), jnp.float32)
  b_qkv = jnp.zeros((9 * A,), jnp.float32)
  row = 0
  for m, (wk, bk) in enumerate(mods):
    d_m = params[wk].shape[-1]
    for r in range(3):                                           # q, k, v
      w_r = in_w[r * A:(r + 1) * A]                              # (A, A)
      b_r = in_b[r * A:(r + 1) * A]                              # (A,)
      w_mod = params[wk][r]                                      # (A, d_m)
      b_mod = params[bk][r, 0]                                   # (A,)
      w_eff = w_r @ w_fc @ w_mod                                 # (A, d_m)
      b_eff = w_r @ (w_fc @ b_mod + b_fc) + b_r                  # (A,)
      if r == 0:                                                 # fold q scale
        w_eff = w_eff * scale
        b_eff = b_eff * scale
      col = (m * 3 + r) * A
      w_qkv = w_qkv.at[row:row + d_m, col:col + A].set(w_eff.T)
      b_qkv = b_qkv.at[col:col + A].set(b_eff)
    row += d_m

  # Replicated out_proj: out row (m*S + s) = ctx_m @ out_w.T + out_b.
  eye3 = jnp.eye(3, dtype=jnp.float32)
  w_rep = jnp.einsum("mn,ab->manb", eye3, out_w.T)               # (3,A,3,A)
  w_rep = jnp.broadcast_to(w_rep[:, :, :, None, :], (3, A, 3, S, A))
  w_rep = w_rep.reshape(3 * A, 3 * S * A)
  b_rep = jnp.tile(out_b, 3 * S)

  return w_qkv, b_qkv[None, :], w_rep, b_rep[None, :], d_tot


# ----------------------------------------------------------------------------
# Forward wrapper
# ----------------------------------------------------------------------------
def cross_attention_forward(x_text, x_image, x_time, params, *, seq_len,
                            attention_dim):
  B = x_text.shape[0]
  A = attention_dim
  S = seq_len
  out_cols = 3 * S * A

  w_qkv, b_qkv, w_rep, b_rep, d_tot = fold_params(
      params, seq_len=seq_len, attention_dim=attention_dim)

  # Single fused input (one DMA per step instead of three).
  x_cat = jnp.concatenate([x_text, x_image, x_time], axis=-1)    # (B, Dtot)

  # Batch blocking: keep >= 2 grid steps when B >= 2 so both v7x TCs get work.
  b_blk = min(8, B)
  while B > 1 and b_blk > 1 and pl.cdiv(B, b_blk) < 2:
    b_blk //= 2
  grid_b = pl.cdiv(B, b_blk)
  b_pad = grid_b * b_blk
  if b_pad != B:
    x_cat = jnp.pad(x_cat, ((0, b_pad - B), (0, 0)))
  x_cat = x_cat.reshape(grid_b, b_blk, d_tot)

  kernel = functools.partial(cross_attention_kernel, attention_dim=A)

  def full_spec(arr):
    nd = arr.ndim
    return pl.BlockSpec(arr.shape, lambda g, _nd=nd: (0,) * _nd)

  out = pl.pallas_call(
      kernel,
      out_shape=jax.ShapeDtypeStruct((grid_b, b_blk, out_cols), jnp.float32),
      grid=(grid_b,),
      in_specs=[
          pl.BlockSpec((1, b_blk, d_tot), lambda g: (g, 0, 0)),
          full_spec(w_qkv), full_spec(b_qkv),
          full_spec(w_rep), full_spec(b_rep),
      ],
      out_specs=pl.BlockSpec((1, b_blk, out_cols), lambda g: (g, 0, 0)),
      compiler_params=pltpu.CompilerParams(dimension_semantics=("parallel",)),
  )(x_cat, w_qkv, b_qkv, w_rep, b_rep)

  # Wrapper-side (free) reshape back to the module's (B, 3S, A) layout.
  return out.reshape(b_pad, out_cols)[:B].reshape(B, 3 * S, A)


# ----------------------------------------------------------------------------
# Deterministic parameter construction (shapes from the module's __init__)
# ----------------------------------------------------------------------------
def init_params(key, d_text, d_image, d_time, attention_dim):
  A = attention_dim
  keys = iter(jax.random.split(key, 32))

  def linear(out_f, in_f):
    bound = 1.0 / math.sqrt(in_f)
    w = jax.random.uniform(next(keys), (out_f, in_f), jnp.float32, -bound, bound)
    b = jax.random.uniform(next(keys), (out_f,), jnp.float32, -bound, bound)
    return w, b

  def qkv_stack(d):
    ws, bs = zip(*(linear(A, d) for _ in range(3)))
    return jnp.stack(ws, axis=0), jnp.stack([b[None, :] for b in bs], axis=0)

  w_text, b_text = qkv_stack(d_text)
  w_image, b_image = qkv_stack(d_image)
  w_time, b_time = qkv_stack(d_time)
  w_fc, b_fc = linear(A, A)           # TODO(synk): `self.fc` is undefined in the
  #                                     PyTorch __init__; synthesized here.
  in_w, in_b = linear(3 * A, A)       # MHA in_proj_weight / in_proj_bias
  out_w, out_b = linear(A, A)         # MHA out_proj

  return dict(
      w_text=w_text, b_text=b_text,
      w_image=w_image, b_image=b_image,
      w_time=w_time, b_time=b_time,
      w_fc=w_fc, b_fc=b_fc[None, :],
      in_proj_w=in_w, in_proj_b=in_b[None, :],
      out_w=out_w, out_b=out_b[None, :],
  )


# ----------------------------------------------------------------------------
# Pure-JAX reference (mirrors the PyTorch forward, no folding) for correctness
# ----------------------------------------------------------------------------
def reference_forward(x_text, x_image, x_time, p, *, seq_len, attention_dim):
  A = attention_dim

  def expand(x):
    return jnp.broadcast_to(x[:, None, :], (x.shape[0], seq_len, x.shape[1]))

  def lin(x, w, b):
    return jnp.einsum("bsd,ad->bsa", x, w) + b

  xt, xi, xm = expand(x_text), expand(x_image), expand(x_time)

  def role(r):
    return jnp.concatenate([lin(xt, p["w_text"][r], p["b_text"][r, 0]),
                            lin(xi, p["w_image"][r], p["b_image"][r, 0]),
                            lin(xm, p["w_time"][r], p["b_time"][r, 0])], axis=1)

  queries, keys, values = role(0), role(1), role(2)
  queries = lin(queries, p["w_fc"], p["b_fc"][0])
  keys = lin(keys, p["w_fc"], p["b_fc"][0])
  values = lin(values, p["w_fc"], p["b_fc"][0])

  in_w, in_b = p["in_proj_w"], p["in_proj_b"][0]
  q = lin(queries, in_w[0 * A:1 * A], in_b[0 * A:1 * A])
  k = lin(keys, in_w[1 * A:2 * A], in_b[1 * A:2 * A])
  v = lin(values, in_w[2 * A:3 * A], in_b[2 * A:3 * A])

  scores = jnp.einsum("bqa,bka->bqk", q * (1.0 / math.sqrt(A)), k)
  attn = jax.nn.softmax(scores, axis=-1)
  ctx = jnp.einsum("bqk,bka->bqa", attn, v)
  return lin(ctx, p["out_w"], p["out_b"][0])


if __name__ == "__main__":
  B = 2
  D_TEXT, D_IMAGE, D_TIME = 16, 24, 8
  ATTN_DIM = 32
  SEQ_LEN = 8

  root = jax.random.PRNGKey(0)
  k_t, k_i, k_m, k_p = jax.random.split(root, 4)
  text_features = jax.random.normal(k_t, (B, D_TEXT), jnp.float32)
  image_features = jax.random.normal(k_i, (B, D_IMAGE), jnp.float32)
  time_features = jax.random.normal(k_m, (B, D_TIME), jnp.float32)
  params = init_params(k_p, D_TEXT, D_IMAGE, D_TIME, ATTN_DIM)

  out = cross_attention_forward(text_features, image_features, time_features,
                                params, seq_len=SEQ_LEN, attention_dim=ATTN_DIM)
  out = jax.block_until_ready(out)

  ref = reference_forward(text_features, image_features, time_features, params,
                          seq_len=SEQ_LEN, attention_dim=ATTN_DIM)
  assert out.shape == (B, 3 * SEQ_LEN, ATTN_DIM), out.shape
  assert jnp.allclose(out, ref, atol=2e-3, rtol=2e-3), "mismatch vs JAX reference"

  print("KERNEL_OK")
</pallas_src>

<mosaic_0001>
module attributes {stable_mosaic.version = 11 : i64} {
  func.func @cross_attention_kernel(%arg0: i32, %arg1: memref<1x1x48xf32, #tpu.memory_space<vmem>>, %arg2: memref<48x288xf32, #tpu.memory_space<vmem>>, %arg3: memref<1x288xf32, #tpu.memory_space<vmem>>, %arg4: memref<96x768xf32, #tpu.memory_space<vmem>>, %arg5: memref<1x768xf32, #tpu.memory_space<vmem>>, %arg6: memref<1x1x768xf32, #tpu.memory_space<vmem>>) attributes {dimension_semantics = [#tpu.dimension_semantics<parallel>], iteration_bounds = array<i64: 2>, scalar_prefetch = 0 : i64, scratch_operands = 0 : i64, tpu.core_type = #tpu.core_type<tc>, window_params = [{transform_indices = @transform_0, window_bounds = array<i64: 1, 1, 48>}, {pipeline_mode = #tpu.pipeline_mode<synchronous>, transform_indices = @transform_1, window_bounds = array<i64: 48, 288>}, {pipeline_mode = #tpu.pipeline_mode<synchronous>, transform_indices = @transform_2, window_bounds = array<i64: 1, 288>}, {pipeline_mode = #tpu.pipeline_mode<synchronous>, transform_indices = @transform_3, window_bounds = array<i64: 96, 768>}, {pipeline_mode = #tpu.pipeline_mode<synchronous>, transform_indices = @transform_4, window_bounds = array<i64: 1, 768>}, {transform_indices = @transform_5, window_bounds = array<i64: 1, 1, 768>}]} {
    %c0 = arith.constant 0 : index
    %c0_0 = arith.constant 0 : index
    %c0_1 = arith.constant 0 : index
    %0 = vector.load %arg1[%c0, %c0_0, %c0_1] : memref<1x1x48xf32, #tpu.memory_space<vmem>>, vector<1x1x48xf32>
    %1 = vector.shape_cast %0 : vector<1x1x48xf32> to vector<1x48xf32>
    %c0_2 = arith.constant 0 : index
    %c0_3 = arith.constant 0 : index
    %2 = vector.load %arg2[%c0_2, %c0_3] : memref<48x288xf32, #tpu.memory_space<vmem>>, vector<48x288xf32>
    %cst = arith.constant dense<0.000000e+00> : vector<1x288xf32>
    %3 = tpu.matmul %1, %2, %cst {dimension_numbers = #tpu.dot_dimension_numbers<[1], [0], [0], [1], [0, 0, 1, 1], [], []>} : vector<1x48xf32>, vector<48x288xf32>, vector<1x288xf32> -> vector<1x288xf32>
    %c0_4 = arith.constant 0 : index
    %c0_5 = arith.constant 0 : index
    %4 = vector.load %arg3[%c0_4, %c0_5] : memref<1x288xf32, #tpu.memory_space<vmem>>, vector<1x288xf32>
    %5 = arith.addf %3, %4 : vector<1x288xf32>
    %6 = vector.extract_strided_slice %5 {offsets = [0, 0], sizes = [1, 32], strides = [1, 1]} : vector<1x288xf32> to vector<1x32xf32>
    %7 = vector.extract_strided_slice %5 {offsets = [0, 96], sizes = [1, 32], strides = [1, 1]} : vector<1x288xf32> to vector<1x32xf32>
    %8 = vector.extract_strided_slice %5 {offsets = [0, 192], sizes = [1, 32], strides = [1, 1]} : vector<1x288xf32> to vector<1x32xf32>
    %9 = vector.extract_strided_slice %5 {offsets = [0, 32], sizes = [1, 32], strides = [1, 1]} : vector<1x288xf32> to vector<1x32xf32>
    %10 = vector.extract_strided_slice %5 {offsets = [0, 128], sizes = [1, 32], strides = [1, 1]} : vector<1x288xf32> to vector<1x32xf32>
    %11 = vector.extract_strided_slice %5 {offsets = [0, 224], sizes = [1, 32], strides = [1, 1]} : vector<1x288xf32> to vector<1x32xf32>
    %12 = vector.extract_strided_slice %5 {offsets = [0, 64], sizes = [1, 32], strides = [1, 1]} : vector<1x288xf32> to vector<1x32xf32>
    %13 = vector.extract_strided_slice %5 {offsets = [0, 160], sizes = [1, 32], strides = [1, 1]} : vector<1x288xf32> to vector<1x32xf32>
    %14 = vector.extract_strided_slice %5 {offsets = [0, 256], sizes = [1, 32], strides = [1, 1]} : vector<1x288xf32> to vector<1x32xf32>
    %15 = arith.mulf %6, %9 : vector<1x32xf32>
    %cst_6 = arith.constant dense<0.000000e+00> : vector<1xf32>
    %16 = vector.multi_reduction <add>, %15, %cst_6 [1] : vector<1x32xf32> to vector<1xf32>
    %17 = vector.shape_cast %16 : vector<1xf32> to vector<1x1xf32>
    %18 = arith.mulf %6, %10 : vector<1x32xf32>
    %cst_7 = arith.constant dense<0.000000e+00> : vector<1xf32>
    %19 = vector.multi_reduction <add>, %18, %cst_7 [1] : vector<1x32xf32> to vector<1xf32>
    %20 = vector.shape_cast %19 : vector<1xf32> to vector<1x1xf32>
    %21 = arith.mulf %6, %11 : vector<1x32xf32>
    %cst_8 = arith.constant dense<0.000000e+00> : vector<1xf32>
    %22 = vector.multi_reduction <add>, %21, %cst_8 [1] : vector<1x32xf32> to vector<1xf32>
    %23 = vector.shape_cast %22 : vector<1xf32> to vector<1x1xf32>
    %24 = arith.maximumf %17, %20 : vector<1x1xf32>
    %25 = arith.maximumf %24, %23 : vector<1x1xf32>
    %26 = arith.subf %17, %25 : vector<1x1xf32>
    %27 = math.exp %26 : vector<1x1xf32>
    %28 = arith.subf %20, %25 : vector<1x1xf32>
    %29 = math.exp %28 : vector<1x1xf32>
    %30 = arith.subf %23, %25 : vector<1x1xf32>
    %31 = math.exp %30 : vector<1x1xf32>
    %32 = arith.addf %27, %29 : vector<1x1xf32>
    %33 = arith.addf %32, %31 : vector<1x1xf32>
    %34 = tpu.reciprocal %33 {approx = true} : vector<1x1xf32> -> vector<1x1xf32>
    %35 = arith.mulf %27, %34 : vector<1x1xf32>
    %36 = vector.broadcast %35 : vector<1x1xf32> to vector<1x32xf32>
    %37 = arith.mulf %36, %12 : vector<1x32xf32>
    %38 = arith.mulf %29, %34 : vector<1x1xf32>
    %39 = vector.broadcast %38 : vector<1x1xf32> to vector<1x32xf32>
    %40 = arith.mulf %39, %13 : vector<1x32xf32>
    %41 = arith.addf %37, %40 : vector<1x32xf32>
    %42 = arith.mulf %31, %34 : vector<1x1xf32>
    %43 = vector.broadcast %42 : vector<1x1xf32> to vector<1x32xf32>
    %44 = arith.mulf %43, %14 : vector<1x32xf32>
    %45 = arith.addf %41, %44 : vector<1x32xf32>
    %46 = arith.mulf %7, %9 : vector<1x32xf32>
    %cst_9 = arith.constant dense<0.000000e+00> : vector<1xf32>
    %47 = vector.multi_reduction <add>, %46, %cst_9 [1] : vector<1x32xf32> to vector<1xf32>
    %48 = vector.shape_cast %47 : vector<1xf32> to vector<1x1xf32>
    %49 = arith.mulf %7, %10 : vector<1x32xf32>
    %cst_10 = arith.constant dense<0.000000e+00> : vector<1xf32>
    %50 = vector.multi_reduction <add>, %49, %cst_10 [1] : vector<1x32xf32> to vector<1xf32>
    %51 = vector.shape_cast %50 : vector<1xf32> to vector<1x1xf32>
    %52 = arith.mulf %7, %11 : vector<1x32xf32>
    %cst_11 = arith.constant dense<0.000000e+00> : vector<1xf32>
    %53 = vector.multi_reduction <add>, %52, %cst_11 [1] : vector<1x32xf32> to vector<1xf32>
    %54 = vector.shape_cast %53 : vector<1xf32> to vector<1x1xf32>
    %55 = arith.maximumf %48, %51 : vector<1x1xf32>
    %56 = arith.maximumf %55, %54 : vector<1x1xf32>
    %57 = arith.subf %48, %56 : vector<1x1xf32>
    %58 = math.exp %57 : vector<1x1xf32>
    %59 = arith.subf %51, %56 : vector<1x1xf32>
    %60 = math.exp %59 : vector<1x1xf32>
    %61 = arith.subf %54, %56 : vector<1x1xf32>
    %62 = math.exp %61 : vector<1x1xf32>
    %63 = arith.addf %58, %60 : vector<1x1xf32>
    %64 = arith.addf %63, %62 : vector<1x1xf32>
    %65 = tpu.reciprocal %64 {approx = true} : vector<1x1xf32> -> vector<1x1xf32>
    %66 = arith.mulf %58, %65 : vector<1x1xf32>
    %67 = vector.broadcast %66 : vector<1x1xf32> to vector<1x32xf32>
    %68 = arith.mulf %67, %12 : vector<1x32xf32>
    %69 = arith.mulf %60, %65 : vector<1x1xf32>
    %70 = vector.broadcast %69 : vector<1x1xf32> to vector<1x32xf32>
    %71 = arith.mulf %70, %13 : vector<1x32xf32>
    %72 = arith.addf %68, %71 : vector<1x32xf32>
    %73 = arith.mulf %62, %65 : vector<1x1xf32>
    %74 = vector.broadcast %73 : vector<1x1xf32> to vector<1x32xf32>
    %75 = arith.mulf %74, %14 : vector<1x32xf32>
    %76 = arith.addf %72, %75 : vector<1x32xf32>
    %77 = arith.mulf %8, %9 : vector<1x32xf32>
    %cst_12 = arith.constant dense<0.000000e+00> : vector<1xf32>
    %78 = vector.multi_reduction <add>, %77, %cst_12 [1] : vector<1x32xf32> to vector<1xf32>
    %79 = vector.shape_cast %78 : vector<1xf32> to vector<1x1xf32>
    %80 = arith.mulf %8, %10 : vector<1x32xf32>
    %cst_13 = arith.constant dense<0.000000e+00> : vector<1xf32>
    %81 = vector.multi_reduction <add>, %80, %cst_13 [1] : vector<1x32xf32> to vector<1xf32>
    %82 = vector.shape_cast %81 : vector<1xf32> to vector<1x1xf32>
    %83 = arith.mulf %8, %11 : vector<1x32xf32>
    %cst_14 = arith.constant dense<0.000000e+00> : vector<1xf32>
    %84 = vector.multi_reduction <add>, %83, %cst_14 [1] : vector<1x32xf32> to vector<1xf32>
    %85 = vector.shape_cast %84 : vector<1xf32> to vector<1x1xf32>
    %86 = arith.maximumf %79, %82 : vector<1x1xf32>
    %87 = arith.maximumf %86, %85 : vector<1x1xf32>
    %88 = arith.subf %79, %87 : vector<1x1xf32>
    %89 = math.exp %88 : vector<1x1xf32>
    %90 = arith.subf %82, %87 : vector<1x1xf32>
    %91 = math.exp %90 : vector<1x1xf32>
    %92 = arith.subf %85, %87 : vector<1x1xf32>
    %93 = math.exp %92 : vector<1x1xf32>
    %94 = arith.addf %89, %91 : vector<1x1xf32>
    %95 = arith.addf %94, %93 : vector<1x1xf32>
    %96 = tpu.reciprocal %95 {approx = true} : vector<1x1xf32> -> vector<1x1xf32>
    %97 = arith.mulf %89, %96 : vector<1x1xf32>
    %98 = vector.broadcast %97 : vector<1x1xf32> to vector<1x32xf32>
    %99 = arith.mulf %98, %12 : vector<1x32xf32>
    %100 = arith.mulf %91, %96 : vector<1x1xf32>
    %101 = vector.broadcast %100 : vector<1x1xf32> to vector<1x32xf32>
    %102 = arith.mulf %101, %13 : vector<1x32xf32>
    %103 = arith.addf %99, %102 : vector<1x32xf32>
    %104 = arith.mulf %93, %96 : vector<1x1xf32>
    %105 = vector.broadcast %104 : vector<1x1xf32> to vector<1x32xf32>
    %106 = arith.mulf %105, %14 : vector<1x32xf32>
    %107 = arith.addf %103, %106 : vector<1x32xf32>
    %108 = tpu.concatenate %45, %76, %107 in 1 : vector<1x32xf32>, vector<1x32xf32>, vector<1x32xf32> -> vector<1x96xf32>
    %c0_15 = arith.constant 0 : index
    %c0_16 = arith.constant 0 : index
    %109 = vector.load %arg4[%c0_15, %c0_16] : memref<96x768xf32, #tpu.memory_space<vmem>>, vector<96x768xf32>
    %cst_17 = arith.constant dense<0.000000e+00> : vector<1x768xf32>
    %110 = tpu.matmul %108, %109, %cst_17 {dimension_numbers = #tpu.dot_dimension_numbers<[1], [0], [0], [1], [0, 0, 1, 1], [], []>} : vector<1x96xf32>, vector<96x768xf32>, vector<1x768xf32> -> vector<1x768xf32>
    %c0_18 = arith.constant 0 : index
    %c0_19 = arith.constant 0 : index
    %111 = vector.load %arg5[%c0_18, %c0_19] : memref<1x768xf32, #tpu.memory_space<vmem>>, vector<1x768xf32>
    %112 = arith.addf %110, %111 : vector<1x768xf32>
    %c0_20 = arith.constant 0 : index
    %c0_21 = arith.constant 0 : index
    %c0_22 = arith.constant 0 : index
    %113 = vector.load %arg6[%c0_20, %c0_21, %c0_22] : memref<1x1x768xf32, #tpu.memory_space<vmem>>, vector<1x1x768xf32>
    %114 = vector.shape_cast %113 : vector<1x1x768xf32> to vector<1x768xf32>
    %115 = vector.shape_cast %112 : vector<1x768xf32> to vector<1x1x768xf32>
    tpu.vector_store %arg6[%c0_20, %c0_21, %c0_22], %115 {strides = array<i32>} : memref<1x1x768xf32, #tpu.memory_space<vmem>>, vector<1x1x768xf32>,
    return
  }
  func.func @transform_0(%arg0: i32) -> (i32, i32, i32) {
    %c0_i32 = arith.constant 0 : i32
    %c0_i32_0 = arith.constant 0 : i32
    %c0_i32_1 = arith.constant 0 : i32
    return %arg0, %c0_i32, %c0_i32_0 : i32, i32, i32
  }
  func.func @transform_1(%arg0: i32) -> (i32, i32) {
    %c0_i32 = arith.constant 0 : i32
    %c0_i32_0 = arith.constant 0 : i32
    %c0_i32_1 = arith.constant 0 : i32
    return %c0_i32, %c0_i32_0 : i32, i32
  }
  func.func @transform_2(%arg0: i32) -> (i32, i32) {
    %c0_i32 = arith.constant 0 : i32
    %c0_i32_0 = arith.constant 0 : i32
    %c0_i32_1 = arith.constant 0 : i32
    return %c0_i32, %c0_i32_0 : i32, i32
  }
  func.func @transform_3(%arg0: i32) -> (i32, i32) {
    %c0_i32 = arith.constant 0 : i32
    %c0_i32_0 = arith.constant 0 : i32
    %c0_i32_1 = arith.constant 0 : i32
    return %c0_i32, %c0_i32_0 : i32, i32
  }
  func.func @transform_4(%arg0: i32) -> (i32, i32) {
    %c0_i32 = arith.constant 0 : i32
    %c0_i32_0 = arith.constant 0 : i32
    %c0_i32_1 = arith.constant 0 : i32
    return %c0_i32, %c0_i32_0 : i32, i32
  }
  func.func @transform_5(%arg0: i32) -> (i32, i32, i32) {
    %c0_i32 = arith.constant 0 : i32
    %c0_i32_0 = arith.constant 0 : i32
    %c0_i32_1 = arith.constant 0 : i32
    return %arg0, %c0_i32, %c0_i32_0 : i32, i32, i32
  }
}

</mosaic_0001>

<llo_original>
// kernel: tpu_custom_call.1
$region0: #{tpu_custom_call.1}
  #allocation0 [shape = 'u32[]', space=smem, size = 0x4, offset = 0x4, fixed_abs, tag = 'smem constant byte address 0x4 - core index']
  #allocation1 [shape = 'u32[144,128]{1,0:T(1,128)}', space=vmem, size = 0x12000, scoped, tag = 'internal scratch']
  %s0 = inlined_call_operand.hbm [shape: f32[2,1,48], index: 0, kind: input, shape index: {}]
  %s1 = inlined_call_operand.hbm [shape: f32[48,288], index: 1, kind: input, shape index: {}]
  %s2 = inlined_call_operand.hbm [shape: f32[1,288], index: 2, kind: input, shape index: {}]
  %s3 = inlined_call_operand.hbm [shape: f32[96,768], index: 3, kind: input, shape index: {}]
  %s4 = inlined_call_operand.vmem [shape: f32[1,768], index: 4, kind: input, shape index: {}]
  %s5 = inlined_call_operand.hbm [shape: f32[2,1,768], index: 5, kind: output, shape index: {}]
  %s6 = sld [smem:[#allocation0]]
  $region69: #{tpu_custom_call.1} parent=0
    _
  %s8 = ssub.s32 1, %s6
  %s9 = scalar_select 0, %s8, %s6
  $region1: #{tpu_custom_call.1} parent=0
    #allocation2 [shape = 'u8[1024]{0}', space=vmem, size = 0x400, scoped, tag = 'input window, operand 0']
    #allocation3 [shape = 's32[2]{0}', space=sflag, size = 0x8, scoped, tag = 'scoped memory for tpu_custom_call.1']
    #allocation4 [shape = 's32[2]{0}', space=sflag, size = 0x8, scoped, tag = 'scoped memory for tpu_custom_call.1']
    #allocation5 [shape = 'u8[73728]{0}', space=vmem, size = 0x12000, scoped, tag = 'input window, operand 1, single buffered']
    #allocation6 [shape = 's32[1]{0}', space=sflag, size = 0x4, scoped, tag = 'scoped memory for tpu_custom_call.1']
    #allocation7 [shape = 'u8[1536]{0}', space=vmem, size = 0x800, scoped, tag = 'input window, operand 2, single buffered']
    #allocation8 [shape = 'u8[294912]{0}', space=vmem, size = 0x48000, scoped, tag = 'input window, operand 3, single buffered']
    #allocation9 [shape = 's32[1]{0}', space=sflag, size = 0x4, scoped, tag = 'scoped memory for tpu_custom_call.1']
    #allocation10 [shape = 'u8[6144]{0}', space=vmem, size = 0x1800, scoped, tag = 'output window, operand 0']
    %10 = vsyncpa [#allocation3], 0
    %s11 = scalar_lea.sflag [#allocation3], 1
    %12 = vsyncpa %s11, 0
    %13 = vsyncpa [#allocation6], 0
    %14 = vsyncpa [#allocation9], 0
    %15 = vsyncpa [#allocation4], 0
    %s16 = scalar_lea.sflag [#allocation4], 1
    %17 = vsyncpa %s16, 0
    loop: start=0, step=1, limit=4
    $region2: #{tpu_custom_call.1} parent=1 // loop_pre_header
      _
    $region3: #{tpu_custom_call.1} parent=1 // loop_header
      %s19 = sphi 0, %s23
      %p20 = scmp.ge.s32.totalorder %s19, 4
      %s29 = sphi 0, %s31
      %s32 = sphi 0, %s29
      %s33 = sphi 0, %s32
      %s49 = sphi 0, %s33
      %s53 = sphi 0, %s53
      %s55 = sphi 0, %s53
      %s56 = sphi 0, %s55
      %s70 = sphi 0, %s56
      %s74 = sphi 0, %s74
      %s76 = sphi 0, %s74
      %s77 = sphi 0, %s76
      %s91 = sphi 0, %s77
      %s95 = sphi 0, %s95
      %s97 = sphi 0, %s95
      %s98 = sphi 0, %s97
      %s112 = sphi 0, %s98
      %s116 = sphi 0, %s116
      %s118 = sphi 0, %s116
      %s119 = sphi 0, %s118
      %s133 = sphi 0, %s119
      %s139 = sphi 0, %s141
      %s142 = sphi 0, %s139
      %s143 = sphi 0, %s142
      %s159 = sphi 0, %s143
    $region4: #{tpu_custom_call.1} parent=1 // loop_header_branch
      %22 = sbr.rel (%p20) target = $region8
    $region5: #{tpu_custom_call.1} parent=1 // loop_body
      %s24 = ssub.s32 %s19, 1
      %s25 = ssub.s32 %s19, 2
      %s26 = sadd.s32 %s19, 1
      %s27 = ssub.s32 %s19, %s26
      %p28 = scmp.eq.s32.totalorder %s27, 0
      %s30 = sadd.s32 %s29, 1
      %s31 = scalar_select %p28, %s29, %s30
      %p34 = pneg %p28
      %p35 = scmp.eq.s32.totalorder %s19, 1
      %p36 = por %p34, %p35
      %p37 = scmp.ne.s32.totalorder %s29, %s32
      %p38 = scmp.eq.s32.totalorder %s19, 0
      %p39 = por %p37, %p38
      %p40 = scmp.ne.s32.totalorder %s29, %s32
      %p41 = scmp.eq.s32.totalorder %s24, 1
      %p42 = por %p40, %p41
      %p43 = scmp.ne.s32.totalorder %s32, %s33
      %p44 = scmp.eq.s32.totalorder %s24, 0
      %p45 = por %p43, %p44
      %p46 = scmp.ne.s32.totalorder %s32, %s33
      %p47 = scmp.eq.s32.totalorder %s25, 1
      %p48 = por %p46, %p47
      %p50 = scmp.ne.s32.totalorder %s33, %s49
      %p51 = scmp.eq.s32.totalorder %s25, 0
      %p52 = por %p50, %p51
      %s54 = sadd.s32 %s53, 1
      %p57 = scmp.eq.s32.totalorder %s19, 1
      %p58 = scmp.ne.s32.totalorder %s53, %s55
      %p59 = scmp.eq.s32.totalorder %s19, 0
      %p60 = por %p58, %p59
      %p61 = scmp.ne.s32.totalorder %s53, %s55
      %p62 = scmp.eq.s32.totalorder %s24, 1
      %p63 = por %p61, %p62
      %p64 = scmp.ne.s32.totalorder %s55, %s56
      %p65 = scmp.eq.s32.totalorder %s24, 0
      %p66 = por %p64, %p65
      %p67 = scmp.ne.s32.totalorder %s55, %s56
      %p68 = scmp.eq.s32.totalorder %s25, 1
      %p69 = por %p67, %p68
      %p71 = scmp.ne.s32.totalorder %s56, %s70
      %p72 = scmp.eq.s32.totalorder %s25, 0
      %p73 = por %p71, %p72
      %s75 = sadd.s32 %s74, 1
      %p78 = scmp.eq.s32.totalorder %s19, 1
      %p79 = scmp.ne.s32.totalorder %s74, %s76
      %p80 = scmp.eq.s32.totalorder %s19, 0
      %p81 = por %p79, %p80
      %p82 = scmp.ne.s32.totalorder %s74, %s76
      %p83 = scmp.eq.s32.totalorder %s24, 1
      %p84 = por %p82, %p83
      %p85 = scmp.ne.s32.totalorder %s76, %s77
      %p86 = scmp.eq.s32.totalorder %s24, 0
      %p87 = por %p85, %p86
      %p88 = scmp.ne.s32.totalorder %s76, %s77
      %p89 = scmp.eq.s32.totalorder %s25, 1
      %p90 = por %p88, %p89
      %p92 = scmp.ne.s32.totalorder %s77, %s91
      %p93 = scmp.eq.s32.totalorder %s25, 0
      %p94 = por %p92, %p93
      %s96 = sadd.s32 %s95, 1
      %p99 = scmp.eq.s32.totalorder %s19, 1
      %p100 = scmp.ne.s32.totalorder %s95, %s97
      %p101 = scmp.eq.s32.totalorder %s19, 0
      %p102 = por %p100, %p101
      %p103 = scmp.ne.s32.totalorder %s95, %s97
      %p104 = scmp.eq.s32.totalorder %s24, 1
      %p105 = por %p103, %p104
      %p106 = scmp.ne.s32.totalorder %s97, %s98
      %p107 = scmp.eq.s32.totalorder %s24, 0
      %p108 = por %p106, %p107
      %p109 = scmp.ne.s32.totalorder %s97, %s98
      %p110 = scmp.eq.s32.totalorder %s25, 1
      %p111 = por %p109, %p110
      %p113 = scmp.ne.s32.totalorder %s98, %s112
      %p114 = scmp.eq.s32.totalorder %s25, 0
      %p115 = por %p113, %p114
      %s117 = sadd.s32 %s116, 1
      %p120 = scmp.eq.s32.totalorder %s19, 1
      %p121 = scmp.ne.s32.totalorder %s116, %s118
      %p122 = scmp.eq.s32.totalorder %s19, 0
      %p123 = por %p121, %p122
      %p124 = scmp.ne.s32.totalorder %s116, %s118
      %p125 = scmp.eq.s32.totalorder %s24, 1
      %p126 = por %p124, %p125
      %p127 = scmp.ne.s32.totalorder %s118, %s119
      %p128 = scmp.eq.s32.totalorder %s24, 0
      %p129 = por %p127, %p128
      %p130 = scmp.ne.s32.totalorder %s118, %s119
      %p131 = scmp.eq.s32.totalorder %s25, 1
      %p132 = por %p130, %p131
      %p134 = scmp.ne.s32.totalorder %s119, %s133
      %p135 = scmp.eq.s32.totalorder %s25, 0
      %p136 = por %p134, %p135
      %s137 = ssub.s32 %s19, %s26
      %p138 = scmp.eq.s32.totalorder %s137, 0
      %s140 = sadd.s32 %s139, 1
      %s141 = scalar_select %p138, %s139, %s140
      %p144 = pneg %p138
      %p145 = scmp.eq.s32.totalorder %s19, 1
      %p146 = por %p144, %p145
      %p147 = scmp.ne.s32.totalorder %s139, %s142
      %p148 = scmp.eq.s32.totalorder %s19, 0
      %p149 = por %p147, %p148
      %p150 = scmp.ne.s32.totalorder %s139, %s142
      %p151 = scmp.eq.s32.totalorder %s24, 1
      %p152 = por %p150, %p151
      %p153 = scmp.ne.s32.totalorder %s142, %s143
      %p154 = scmp.eq.s32.totalorder %s24, 0
      %p155 = por %p153, %p154
      %p156 = scmp.ne.s32.totalorder %s142, %s143
      %p157 = scmp.eq.s32.totalorder %s25, 1
      %p158 = por %p156, %p157
      %p160 = scmp.ne.s32.totalorder %s143, %s159
      %p161 = scmp.eq.s32.totalorder %s25, 0
      %p162 = por %p160, %p161
      %p163 = scmp.le.s32.totalorder 1, %s19
      %p164 = scmp.lt.s32.totalorder %s19, 3
      %p165 = pnand %p163, %p164
      %p166 = pneg %p165
      // Predicated region
      $region9: #{tpu_custom_call.1} parent=5 // pred_check
        _
      $region10: #{tpu_custom_call.1} parent=5 // pred_check_branch
        %168 = sbr.rel (%p165) target = $region12
      $region11: #{tpu_custom_call.1} parent=5 // pred_region
        %s169 = ssub.s32 %s19, 1
        // Predicated region
        $region13: #{tpu_custom_call.1} parent=11 // pred_check
          %p170 = pneg %p66
        $region14: #{tpu_custom_call.1} parent=11 // pred_check_branch
          %172 = sbr.rel (%p170) target = $region16
        $region15: #{tpu_custom_call.1} parent=11 // pred_region
          %s174 = ssub.s32 2304, 2304
          %175 = vsyncadd [#allocation6], %s174
          %s176 = sshll.u32 [#allocation5], 4
          %s177 = int_to_ptr.vmem [resolvable:$true] %s176
          %182 = dma.hbm_to_vmem [thread:$0]  %s1, 2304, %s177, [#allocation6], 384, 384, 24
        $region16: #{tpu_custom_call.1} parent=11 // pred_fallthru
          _
        // Predicated region
        $region17: #{tpu_custom_call.1} parent=11 // pred_check
          %p183 = pneg %p87
        $region18: #{tpu_custom_call.1} parent=11 // pred_check_branch
          %185 = sbr.rel (%p183) target = $region20
        $region19: #{tpu_custom_call.1} parent=11 // pred_region
          %s187 = ssub.s32 48, 48
          %188 = vsyncadd [#allocation6], %s187
          %s190 = sshll.u32 [#allocation7], 4
          %s191 = int_to_ptr.vmem [resolvable:$true] %s190
          %193 = dma.hbm_to_vmem [thread:$0]  %s2, 48, %s191, [#allocation6]
        $region20: #{tpu_custom_call.1} parent=11 // pred_fallthru
          _
        // Predicated region
        $region21: #{tpu_custom_call.1} parent=11 // pred_check
          %p194 = pneg %p108
        $region22: #{tpu_custom_call.1} parent=11 // pred_check_branch
          %196 = sbr.rel (%p194) target = $region24
        $region23: #{tpu_custom_call.1} parent=11 // pred_region
          %s198 = ssub.s32 9216, 9216
          %199 = vsyncadd [#allocation9], %s198
          %s200 = sshll.u32 [#allocation8], 4
          %s201 = int_to_ptr.vmem [resolvable:$true] %s200
          %206 = dma.hbm_to_vmem [thread:$0]  %s3, 9216, %s201, [#allocation9], 768, 768, 48
        $region24: #{tpu_custom_call.1} parent=11 // pred_fallthru
          _
        // Predicated region
        $region25: #{tpu_custom_call.1} parent=11 // pred_check
          %p207 = pneg %p129
        $region26: #{tpu_custom_call.1} parent=11 // pred_check_branch
          %209 = sbr.rel (%p207) target = $region28
        $region27: #{tpu_custom_call.1} parent=11 // pred_region
          _
        $region28: #{tpu_custom_call.1} parent=11 // pred_fallthru
          _
      $region12: #{tpu_custom_call.1} parent=5 // pred_fallthru
        _
      %p210 = scmp.lt.s32.totalorder %s19, 2
      // Predicated region
      $region29: #{tpu_custom_call.1} parent=5 // pred_check
        %p211 = pneg %p210
      $region30: #{tpu_custom_call.1} parent=5 // pred_check_branch
        %213 = sbr.rel (%p211) target = $region32
      $region31: #{tpu_custom_call.1} parent=5 // pred_region
        // Predicated region
        $region33: #{tpu_custom_call.1} parent=31 // pred_check
          %p214 = pneg %p39
        $region34: #{tpu_custom_call.1} parent=31 // pred_check_branch
          %216 = sbr.rel (%p214) target = $region36
        $region35: #{tpu_custom_call.1} parent=31 // pred_region
          %s217 = sand.u32 %s29, 1
          %s218 = scalar_lea.sflag [#allocation3], %s217
          %s219 = sand.u32 %s29, 1
          %s220 = scalar_lea.vmem [#allocation2], %s219
          %s222 = ssub.s32 16, 16
          %223 = vsyncadd %s218, %s222
          %s224 = smul.addr %s19, 16
          %s225 = scalar_lea.hbm %s0, %s224
          %s227 = sshll.u32 %s220, 4
          %s228 = int_to_ptr.vmem [resolvable:$true] %s227
          %230 = dma.hbm_to_vmem [thread:$0]  %s225, 16, %s228, %s218
        $region36: #{tpu_custom_call.1} parent=31 // pred_fallthru
          _
      $region32: #{tpu_custom_call.1} parent=5 // pred_fallthru
        _
      %p231 = scmp.le.s32.totalorder 1, %s19
      %p232 = scmp.lt.s32.totalorder %s19, 3
      %p233 = pnand %p231, %p232
      %p234 = pneg %p233
      // Predicated region
      $region37: #{tpu_custom_call.1} parent=5 // pred_check
        _
      $region38: #{tpu_custom_call.1} parent=5 // pred_check_branch
        %236 = sbr.rel (%p233) target = $region40
      $region39: #{tpu_custom_call.1} parent=5 // pred_region
        %s237 = ssub.s32 %s19, 1
        %s238 = sand.u32 %s32, 1
        %s239 = scalar_lea.sflag [#allocation3], %s238
        %s240 = sand.u32 %s32, 1
        %s241 = scalar_lea.vmem [#allocation2], %s240
        // Predicated region
        $region41: #{tpu_custom_call.1} parent=39 // pred_check
          %p242 = pneg %p45
        $region42: #{tpu_custom_call.1} parent=39 // pred_check_branch
          %244 = sbr.rel (%p242) target = $region44
        $region43: #{tpu_custom_call.1} parent=39 // pred_region
          %245 = dma.done %s239, 16
        $region44: #{tpu_custom_call.1} parent=39 // pred_fallthru
          _
        // Predicated region
        $region45: #{tpu_custom_call.1} parent=39 // pred_check
          %p246 = pneg %p66
        $region46: #{tpu_custom_call.1} parent=39 // pred_check_branch
          %248 = sbr.rel (%p246) target = $region48
        $region47: #{tpu_custom_call.1} parent=39 // pred_region
          %249 = dma.done [#allocation6], 2304
        $region48: #{tpu_custom_call.1} parent=39 // pred_fallthru
          _
        // Predicated region
        $region49: #{tpu_custom_call.1} parent=39 // pred_check
          %p250 = pneg %p87
        $region50: #{tpu_custom_call.1} parent=39 // pred_check_branch
          %252 = sbr.rel (%p250) target = $region52
        $region51: #{tpu_custom_call.1} parent=39 // pred_region
          %253 = dma.done [#allocation6], 48
        $region52: #{tpu_custom_call.1} parent=39 // pred_fallthru
          _
        // Predicated region
        $region53: #{tpu_custom_call.1} parent=39 // pred_check
          %p254 = pneg %p108
        $region54: #{tpu_custom_call.1} parent=39 // pred_check_branch
          %256 = sbr.rel (%p254) target = $region56
        $region55: #{tpu_custom_call.1} parent=39 // pred_region
          %257 = dma.done [#allocation9], 9216
        $region56: #{tpu_custom_call.1} parent=39 // pred_fallthru
          _
        %s258 = sand.u32 %s32, 1
        %s259 = scalar_lea.sflag [#allocation3], %s258
        %s260 = sand.u32 %s32, 1
        %s261 = scalar_lea.vmem [#allocation2], %s260
        %p262 = pneg %p45
        %p263 = pneg %p42
        %p264 = pneg %p66
        %p265 = pneg %p63
        %p266 = pneg %p87
        %p267 = pneg %p84
        %p268 = pneg %p108
        %p269 = pneg %p105
        %p270 = pneg %p129
        %p271 = pneg %p126
        %p272 = pneg %p155
        %p273 = pneg %p152
        %s274 = sand.u32 %s142, 1
        %s275 = scalar_lea.sflag [#allocation4], %s274
        %s276 = sand.u32 %s142, 1
        %s277 = smul.addr %s276, 6
        %s278 = scalar_lea.vmem [#allocation10], %s277
        %v279 = vld [vmem:[%s241] sm:$0x1]
        %v280 = vld [vmem:[#allocation5] sm:$0xff]
        %v281 = vld [vmem:[#allocation5 + $0x8] sm:$0xff]
        %v282 = vld [vmem:[#allocation5 + $0x10] sm:$0xff]
        %v283 = vld [vmem:[#allocation5 + $0x18] sm:$0xff]
        %v284 = vld [vmem:[#allocation5 + $0x20] sm:$0xff]
        %v285 = vld [vmem:[#allocation5 + $0x28] sm:$0xff]
        %v286 = vld [vmem:[#allocation5 + $0x30] sm:$0xff]
        %v287 = vld [vmem:[#allocation5 + $0x38] sm:$0xff]
        %v288 = vld [vmem:[#allocation5 + $0x40] sm:$0xff]
        %v289 = vld [vmem:[#allocation5 + $0x48] sm:$0xff]
        %v290 = vld [vmem:[#allocation5 + $0x50] sm:$0xff]
        %v291 = vld [vmem:[#allocation5 + $0x58] sm:$0xff]
        %v292 = vld [vmem:[#allocation5 + $0x60] sm:$0xff]
        %v293 = vld [vmem:[#allocation5 + $0x68] sm:$0xff]
        %v294 = vld [vmem:[#allocation5 + $0x70] sm:$0xff]
        %v295 = vld [vmem:[#allocation5 + $0x78] sm:$0xff]
        %v296 = vld [vmem:[#allocation5 + $0x80] sm:$0xff]
        %v297 = vld [vmem:[#allocation5 + $0x88] sm:$0xff]
        %v298 = vld [vmem:[#allocation7] sm:$0x7]
        %v300 = vlaneseq
        %v301 = vshrl.u32 %v300, 7
        %v302 = vsub.s32 0, %v301
        %v303 = vrot.slane %v298, %v302
        %v304 = vlaneseq
        %v305 = vshrl.u32 %v304, 7
        %v306 = vsub.s32 1, %v305
        %v307 = vrot.slane %v298, %v306
        %v308 = vlaneseq
        %v309 = vshrl.u32 %v308, 7
        %v310 = vsub.s32 2, %v309
        %v311 = vrot.slane %v298, %v310
        %vm315 = vcmask 392192
        %v317 = vsel %vm315, %v279, 0
        %319 = vmatprep.subr.mxu0 0.0
        %320 = vmatpush1.msra.mxu0 0.0
        %321 = vmatprep.subr.mxu0 0.0
        %322 = vmatpush1.msra.mxu0 0.0
        %323 = vmatprep.subr.mxu0 0.0
        %324 = vmatpush1.msra.mxu0 0.0
        %325 = vmatprep.subr.mxu0 0.0
        %326 = vmatpush1.msra.mxu0 0.0
        %327 = vmatprep.subr.mxu0 0.0
        %328 = vmatpush1.msra.mxu0 0.0
        %329 = vmatprep.subr.mxu0 0.0
        %330 = vmatpush1.msra.mxu0 0.0
        %331 = vmatprep.subr.mxu0 0.0
        %332 = vmatpush1.msra.mxu0 0.0
        %333 = vmatprep.subr.mxu0 0.0
        %334 = vmatpush1.msra.mxu0 0.0
        %335 = vmatprep.subr.mxu0 0.0
        %336 = vmatpush1.msra.mxu0 0.0
        %337 = vmatprep.subr.mxu0 0.0
        %338 = vmatpush1.msra.mxu0 0.0
        %339 = vmatprep.subr.mxu0 %v296
        %340 = vmatpush1.msra.mxu0 %v295
        %341 = vmatprep.subr.mxu0 %v293
        %342 = vmatpush1.msra.mxu0 %v292
        %343 = vmatprep.subr.mxu0 %v290
        %344 = vmatpush1.msra.mxu0 %v289
        %345 = vmatprep.subr.mxu0 %v287
        %346 = vmatpush1.msra.mxu0 %v286
        %347 = vmatprep.subr.mxu0 %v284
        %348 = vmatpush1.msra.mxu0 %v283
        %349 = vmatprep.subr.mxu0 %v281
        %350 = vmatpush1.msra.mxu0 %v280
        %351 = vmatprep.subr.mxu0 0.0
        %352 = vmatpush2.msra.mxu0 0.0
        %353 = vmatprep.subr.mxu0 0.0
        %354 = vmatpush2.msra.mxu0 0.0
        %355 = vmatprep.subr.mxu0 0.0
        %356 = vmatpush2.msra.mxu0 0.0
        %357 = vmatprep.subr.mxu0 0.0
        %358 = vmatpush2.msra.mxu0 0.0
        %359 = vmatprep.subr.mxu0 0.0
        %360 = vmatpush2.msra.mxu0 0.0
        %361 = vmatprep.subr.mxu0 0.0
        %362 = vmatpush2.msra.mxu0 0.0
        %363 = vmatprep.subr.mxu0 0.0
        %364 = vmatpush2.msra.mxu0 0.0
        %365 = vmatprep.subr.mxu0 0.0
        %366 = vmatpush2.msra.mxu0 0.0
        %367 = vmatprep.subr.mxu0 0.0
        %368 = vmatpush2.msra.mxu0 0.0
        %369 = vmatprep.subr.mxu0 0.0
        %370 = vmatpush2.msra.mxu0 0.0
        %371 = vmatprep.subr.mxu0 0.0
        %372 = vmatpush2.msra.mxu0 0.0
        %373 = vmatprep.subr.mxu0 0.0
        %374 = vmatpush2.msra.mxu0 0.0
        %375 = vmatprep.subr.mxu0 0.0
        %376 = vmatpush2.msra.mxu0 0.0
        %377 = vmatprep.subr.mxu0 0.0
        %378 = vmatpush2.msra.mxu0 0.0
        %379 = vmatprep.subr.mxu0 0.0
        %380 = vmatpush2.msra.mxu0 0.0
        %381 = vmatprep.subr.mxu0 0.0
        %382 = vmatpush2.msra.mxu0 0.0
        %383 = vmatprep.mubr.f32.mxu0 0.0
        %384 = vmatmul.mubr.f32.gmra.mxu0 %v317
        %v385 = vpop.f32.mrf.mxu0
        %v386 = vadd.f32 %v303, %v385
        %v387 = vpop.f32.mrf.mxu0
        %v388 = vadd.f32 %v307, %v387
        %389 = vdwg.mxu0
        %390 = vmatprep.subr.mxu0 0.0
        %391 = vmatpush1.msra.mxu0 0.0
        %392 = vmatprep.subr.mxu0 0.0
        %393 = vmatpush1.msra.mxu0 0.0
        %394 = vmatprep.subr.mxu0 0.0
        %395 = vmatpush1.msra.mxu0 0.0
        %396 = vmatprep.subr.mxu0 0.0
        %397 = vmatpush1.msra.mxu0 0.0
        %398 = vmatprep.subr.mxu0 0.0
        %399 = vmatpush1.msra.mxu0 0.0
        %400 = vmatprep.subr.mxu0 0.0
        %401 = vmatpush1.msra.mxu0 0.0
        %402 = vmatprep.subr.mxu0 0.0
        %403 = vmatpush1.msra.mxu0 0.0
        %404 = vmatprep.subr.mxu0 0.0
        %405 = vmatpush1.msra.mxu0 0.0
        %406 = vmatprep.subr.mxu0 0.0
        %407 = vmatpush1.msra.mxu0 0.0
        %408 = vmatprep.subr.mxu0 0.0
        %409 = vmatpush1.msra.mxu0 0.0
        %410 = vmatprep.subr.mxu0 0.0
        %411 = vmatpush1.msra.mxu0 %v297
        %412 = vmatprep.subr.mxu0 0.0
        %413 = vmatpush1.msra.mxu0 %v294
        %414 = vmatprep.subr.mxu0 0.0
        %415 = vmatpush1.msra.mxu0 %v291
        %416 = vmatprep.subr.mxu0 0.0
        %417 = vmatpush1.msra.mxu0 %v288
        %418 = vmatprep.subr.mxu0 0.0
        %419 = vmatpush1.msra.mxu0 %v285
        %420 = vmatprep.subr.mxu0 0.0
        %421 = vmatpush1.msra.mxu0 %v282
        %422 = vmatprep.subr.mxu0 0.0
        %423 = vmatpush2.msra.mxu0 0.0
        %424 = vmatprep.subr.mxu0 0.0
        %425 = vmatpush2.msra.mxu0 0.0
        %426 = vmatprep.subr.mxu0 0.0
        %427 = vmatpush2.msra.mxu0 0.0
        %428 = vmatprep.subr.mxu0 0.0
        %429 = vmatpush2.msra.mxu0 0.0
        %430 = vmatprep.subr.mxu0 0.0
        %431 = vmatpush2.msra.mxu0 0.0
        %432 = vmatprep.subr.mxu0 0.0
        %433 = vmatpush2.msra.mxu0 0.0
        %434 = vmatprep.subr.mxu0 0.0
        %435 = vmatpush2.msra.mxu0 0.0
        %436 = vmatprep.subr.mxu0 0.0
        %437 = vmatpush2.msra.mxu0 0.0
        %438 = vmatprep.subr.mxu0 0.0
        %439 = vmatpush2.msra.mxu0 0.0
        %440 = vmatprep.subr.mxu0 0.0
        %441 = vmatpush2.msra.mxu0 0.0
        %442 = vmatprep.subr.mxu0 0.0
        %443 = vmatpush2.msra.mxu0 0.0
        %444 = vmatprep.subr.mxu0 0.0
        %445 = vmatpush2.msra.mxu0 0.0
        %446 = vmatprep.subr.mxu0 0.0
        %447 = vmatpush2.msra.mxu0 0.0
        %448 = vmatprep.subr.mxu0 0.0
        %449 = vmatpush2.msra.mxu0 0.0
        %450 = vmatprep.subr.mxu0 0.0
        %451 = vmatpush2.msra.mxu0 0.0
        %452 = vmatprep.subr.mxu0 0.0
        %453 = vmatpush2.msra.mxu0 0.0
        %454 = vmatprep.mubr.f32.mxu0 0.0
        %455 = vmatmul.mubr.f32.gmra.mxu0 %v317
        %v456 = vpop.f32.mrf.mxu0
        %v457 = vadd.f32 %v311, %v456
        %v458 = vpop.f32.mrf.mxu0
        %459 = vdwg.mxu0
        %461 = vrot.lane.b32.xlu0 %v386, 96
        %v462 = vpop.permute.xlu0 %461
        %v464 = vmul.f32 %v386, %v462
        %vm465 = vcmask 253952
        %v466 = vsel %vm465, %v464, 0.0
        %467 = vadd.xlane.f32.xlu0 %v466
        %v468 = vpop.xlane.xlu0 %467
        %v469 = vmul.f32 %v386, %v388
        %v470 = vsel %vm465, %v469, 0.0
        %471 = vadd.xlane.f32.xlu0 %v470
        %v472 = vpop.xlane.xlu0 %471
        %474 = vrot.lane.b32.xlu0 %v388, 32
        %v475 = vpop.permute.xlu0 %474
        %v477 = vmul.f32 %v386, %v475
        %v478 = vsel %vm465, %v477, 0.0
        %479 = vadd.xlane.f32.xlu0 %v478
        %v480 = vpop.xlane.xlu0 %479
        %v481 = vmax.f32 %v468, %v472
        %v482 = vmax.f32 %v481, %v480
        %v483 = vsub.f32 %v468, %v482
        %v484 = vmul.f32 %v483, 1.442695
        %v485 = vpow.pop %v484
        %v486 = vsub.f32 %v472, %v482
        %v487 = vmul.f32 %v486, 1.442695
        %v488 = vpow.pop %v487
        %v489 = vsub.f32 %v480, %v482
        %v490 = vmul.f32 %v489, 1.442695
        %v491 = vpow.pop %v490
        %v492 = vadd.f32 %v485, %v488
        %v493 = vadd.f32 %v492, %v491
        %v494 = vrcp.pop %v493
        %v495 = vmul.f32 %v485, %v494
        %v496 = vmul.f32 %v495, %v386
        %v497 = vmul.f32 %v488, %v494
        %v498 = vmul.f32 %v497, %v388
        %500 = vrot.lane.b32.xlu0 %v498, 32
        %v501 = vpop.permute.xlu0 %500
        %v503 = vadd.f32 %v496, %v501
        %v504 = vmul.f32 %v491, %v494
        %v505 = vmul.f32 %v504, %v457
        %507 = vrot.lane.b32.xlu0 %v505, 64
        %v508 = vpop.permute.xlu0 %507
        %v510 = vadd.f32 %v503, %v508
        %511 = vrot.lane.b32.xlu0 %v386, 64
        %v512 = vpop.permute.xlu0 %511
        %v514 = vmul.f32 %v386, %v512
        %516 = vrot.lane.b32.xlu0 %v514, 32
        %v517 = vpop.permute.xlu0 %516
        %v519 = vsel %vm465, %v517, 0.0
        %520 = vadd.xlane.f32.xlu0 %v519
        %v521 = vpop.xlane.xlu0 %520
        %522 = vrot.lane.b32.xlu0 %v388, 96
        %v523 = vpop.permute.xlu0 %522
        %v525 = vmul.f32 %v386, %v523
        %527 = vrot.lane.b32.xlu0 %v525, 32
        %v528 = vpop.permute.xlu0 %527
        %v530 = vsel %vm465, %v528, 0.0
        %531 = vadd.xlane.f32.xlu0 %v530
        %v532 = vpop.xlane.xlu0 %531
        %534 = vrot.lane.b32.xlu0 %v469, 32
        %v535 = vpop.permute.xlu0 %534
        %v537 = vsel %vm465, %v535, 0.0
        %538 = vadd.xlane.f32.xlu0 %v537
        %v539 = vpop.xlane.xlu0 %538
        %v540 = vmax.f32 %v521, %v532
        %v541 = vmax.f32 %v540, %v539
        %v542 = vsub.f32 %v521, %v541
        %v543 = vmul.f32 %v542, 1.442695
        %v544 = vpow.pop %v543
        %v545 = vsub.f32 %v532, %v541
        %v546 = vmul.f32 %v545, 1.442695
        %v547 = vpow.pop %v546
        %v548 = vsub.f32 %v539, %v541
        %v549 = vmul.f32 %v548, 1.442695
        %v550 = vpow.pop %v549
        %v551 = vadd.f32 %v544, %v547
        %v552 = vadd.f32 %v551, %v550
        %v553 = vrcp.pop %v552
        %v554 = vmul.f32 %v544, %v553
        %v555 = vmul.f32 %v554, %v386
        %v556 = vmul.f32 %v547, %v553
        %v557 = vmul.f32 %v556, %v388
        %559 = vrot.lane.b32.xlu0 %v557, 32
        %v560 = vpop.permute.xlu0 %559
        %v562 = vadd.f32 %v555, %v560
        %v563 = vmul.f32 %v550, %v553
        %v564 = vmul.f32 %v563, %v457
        %566 = vrot.lane.b32.xlu0 %v564, 64
        %v567 = vpop.permute.xlu0 %566
        %v569 = vadd.f32 %v562, %v567
        %570 = vrot.lane.b32.xlu0 %v386, 32
        %v571 = vpop.permute.xlu0 %570
        %v573 = vmul.f32 %v388, %v571
        %575 = vrot.lane.b32.xlu0 %v573, 64
        %v576 = vpop.permute.xlu0 %575
        %v578 = vsel %vm465, %v576, 0.0
        %579 = vadd.xlane.f32.xlu0 %v578
        %v580 = vpop.xlane.xlu0 %579
        %581 = vrot.lane.b32.xlu0 %v388, 64
        %v582 = vpop.permute.xlu0 %581
        %v584 = vmul.f32 %v388, %v582
        %586 = vrot.lane.b32.xlu0 %v584, 64
        %v587 = vpop.permute.xlu0 %586
        %v589 = vsel %vm465, %v587, 0.0
        %590 = vadd.xlane.f32.xlu0 %v589
        %v591 = vpop.xlane.xlu0 %590
        %v592 = vmul.f32 %v388, %v523
        %594 = vrot.lane.b32.xlu0 %v592, 64
        %v595 = vpop.permute.xlu0 %594
        %v597 = vsel %vm465, %v595, 0.0
        %598 = vadd.xlane.f32.xlu0 %v597
        %v599 = vpop.xlane.xlu0 %598
        %v600 = vmax.f32 %v580, %v591
        %v601 = vmax.f32 %v600, %v599
        %v602 = vsub.f32 %v580, %v601
        %v603 = vmul.f32 %v602, 1.442695
        %v604 = vpow.pop %v603
        %v605 = vsub.f32 %v591, %v601
        %v606 = vmul.f32 %v605, 1.442695
        %v607 = vpow.pop %v606
        %v608 = vsub.f32 %v599, %v601
        %v609 = vmul.f32 %v608, 1.442695
        %v610 = vpow.pop %v609
        %v611 = vadd.f32 %v604, %v607
        %v612 = vadd.f32 %v611, %v610
        %v613 = vrcp.pop %v612
        %v614 = vmul.f32 %v604, %v613
        %v615 = vmul.f32 %v614, %v386
        %v616 = vmul.f32 %v607, %v613
        %v617 = vmul.f32 %v616, %v388
        %619 = vrot.lane.b32.xlu0 %v617, 32
        %v620 = vpop.permute.xlu0 %619
        %v622 = vadd.f32 %v615, %v620
        %v623 = vmul.f32 %v610, %v613
        %v624 = vmul.f32 %v623, %v457
        %626 = vrot.lane.b32.xlu0 %v624, 64
        %v627 = vpop.permute.xlu0 %626
        %v629 = vadd.f32 %v622, %v627
        %631 = vrot.lane.b32.xlu0 %v510, 64
        %v632 = vpop.permute.xlu0 %631
        %635 = vrot.lane.b32.xlu0 %v569, 96
        %v636 = vpop.permute.xlu0 %635
        %vm638 = vcmask 261120
        %v639 = vsel %vm638, %v632, %v636
        %vm640 = vcmask 523264
        %v641 = vsel %vm640, %v639, %v629
        %v642 = vld [vmem:[#allocation8] sm:$0xff]
        %v643 = vld [vmem:[#allocation8 + $0x8] sm:$0xff]
        %v644 = vld [vmem:[#allocation8 + $0x10] sm:$0xff]
        %v645 = vld [vmem:[#allocation8 + $0x18] sm:$0xff]
        %v646 = vld [vmem:[#allocation8 + $0x20] sm:$0xff]
        %v647 = vld [vmem:[#allocation8 + $0x28] sm:$0xff]
        %v648 = vld [vmem:[#allocation8 + $0x30] sm:$0xff]
        %v649 = vld [vmem:[#allocation8 + $0x38] sm:$0xff]
        %v650 = vld [vmem:[#allocation8 + $0x40] sm:$0xff]
        %v651 = vld [vmem:[#allocation8 + $0x48] sm:$0xff]
        %v652 = vld [vmem:[#allocation8 + $0x50] sm:$0xff]
        %v653 = vld [vmem:[#allocation8 + $0x58] sm:$0xff]
        %v654 = vld [vmem:[#allocation8 + $0x60] sm:$0xff]
        %v655 = vld [vmem:[#allocation8 + $0x68] sm:$0xff]
        %v656 = vld [vmem:[#allocation8 + $0x70] sm:$0xff]
        %v657 = vld [vmem:[#allocation8 + $0x78] sm:$0xff]
        %v658 = vld [vmem:[#allocation8 + $0x80] sm:$0xff]
        %v659 = vld [vmem:[#allocation8 + $0x88] sm:$0xff]
        %v660 = vld [vmem:[#allocation8 + $0x90] sm:$0xff]
        %v661 = vld [vmem:[#allocation8 + $0x98] sm:$0xff]
        %v662 = vld [vmem:[#allocation8 + $0xa0] sm:$0xff]
        %v663 = vld [vmem:[#allocation8 + $0xa8] sm:$0xff]
        %v664 = vld [vmem:[#allocation8 + $0xb0] sm:$0xff]
        %v665 = vld [vmem:[#allocation8 + $0xb8] sm:$0xff]
        %v666 = vld [vmem:[#allocation8 + $0xc0] sm:$0xff]
        %v667 = vld [vmem:[#allocation8 + $0xc8] sm:$0xff]
        %v668 = vld [vmem:[#allocation8 + $0xd0] sm:$0xff]
        %v669 = vld [vmem:[#allocation8 + $0xd8] sm:$0xff]
        %v670 = vld [vmem:[#allocation8 + $0xe0] sm:$0xff]
        %v671 = vld [vmem:[#allocation8 + $0xe8] sm:$0xff]
        %v672 = vld [vmem:[#allocation8 + $0xf0] sm:$0xff]
        %v673 = vld [vmem:[#allocation8 + $0xf8] sm:$0xff]
        %v674 = vld [vmem:[#allocation8 + $0x100] sm:$0xff]
        %v675 = vld [vmem:[#allocation8 + $0x108] sm:$0xff]
        %v676 = vld [vmem:[#allocation8 + $0x110] sm:$0xff]
        %v677 = vld [vmem:[#allocation8 + $0x118] sm:$0xff]
        %v678 = vld [vmem:[#allocation8 + $0x120] sm:$0xff]
        %v679 = vld [vmem:[#allocation8 + $0x128] sm:$0xff]
        %v680 = vld [vmem:[#allocation8 + $0x130] sm:$0xff]
        %v681 = vld [vmem:[#allocation8 + $0x138] sm:$0xff]
        %v682 = vld [vmem:[#allocation8 + $0x140] sm:$0xff]
        %v683 = vld [vmem:[#allocation8 + $0x148] sm:$0xff]
        %v684 = vld [vmem:[#allocation8 + $0x150] sm:$0xff]
        %v685 = vld [vmem:[#allocation8 + $0x158] sm:$0xff]
        %v686 = vld [vmem:[#allocation8 + $0x160] sm:$0xff]
        %v687 = vld [vmem:[#allocation8 + $0x168] sm:$0xff]
        %v688 = vld [vmem:[#allocation8 + $0x170] sm:$0xff]
        %v689 = vld [vmem:[#allocation8 + $0x178] sm:$0xff]
        %v690 = vld [vmem:[#allocation8 + $0x180] sm:$0xff]
        %v691 = vld [vmem:[#allocation8 + $0x188] sm:$0xff]
        %v692 = vld [vmem:[#allocation8 + $0x190] sm:$0xff]
        %v693 = vld [vmem:[#allocation8 + $0x198] sm:$0xff]
        %v694 = vld [vmem:[#allocation8 + $0x1a0] sm:$0xff]
        %v695 = vld [vmem:[#allocation8 + $0x1a8] sm:$0xff]
        %v696 = vld [vmem:[#allocation8 + $0x1b0] sm:$0xff]
        %v697 = vld [vmem:[#allocation8 + $0x1b8] sm:$0xff]
        %v698 = vld [vmem:[#allocation8 + $0x1c0] sm:$0xff]
        %v699 = vld [vmem:[#allocation8 + $0x1c8] sm:$0xff]
        %v700 = vld [vmem:[#allocation8 + $0x1d0] sm:$0xff]
        %v701 = vld [vmem:[#allocation8 + $0x1d8] sm:$0xff]
        %v702 = vld [vmem:[#allocation8 + $0x1e0] sm:$0xff]
        %v703 = vld [vmem:[#allocation8 + $0x1e8] sm:$0xff]
        %v704 = vld [vmem:[#allocation8 + $0x1f0] sm:$0xff]
        %v705 = vld [vmem:[#allocation8 + $0x1f8] sm:$0xff]
        %v706 = vld [vmem:[#allocation8 + $0x200] sm:$0xff]
        %v707 = vld [vmem:[#allocation8 + $0x208] sm:$0xff]
        %v708 = vld [vmem:[#allocation8 + $0x210] sm:$0xff]
        %v709 = vld [vmem:[#allocation8 + $0x218] sm:$0xff]
        %v710 = vld [vmem:[#allocation8 + $0x220] sm:$0xff]
        %v711 = vld [vmem:[#allocation8 + $0x228] sm:$0xff]
        %v712 = vld [vmem:[#allocation8 + $0x230] sm:$0xff]
        %v713 = vld [vmem:[#allocation8 + $0x238] sm:$0xff]
        %v714 = vld [vmem:[%s4] sm:$0x3f]
        %v716 = vlaneseq
        %v717 = vshrl.u32 %v716, 7
        %v718 = vsub.s32 0, %v717
        %v719 = vrot.slane %v714, %v718
        %v720 = vlaneseq
        %v721 = vshrl.u32 %v720, 7
        %v722 = vsub.s32 1, %v721
        %v723 = vrot.slane %v714, %v722
        %v724 = vlaneseq
        %v725 = vshrl.u32 %v724, 7
        %v726 = vsub.s32 2, %v725
        %v727 = vrot.slane %v714, %v726
        %v728 = vlaneseq
        %v729 = vshrl.u32 %v728, 7
        %v730 = vsub.s32 3, %v729
        %v731 = vrot.slane %v714, %v730
        %v732 = vlaneseq
        %v733 = vshrl.u32 %v732, 7
        %v734 = vsub.s32 4, %v733
        %v735 = vrot.slane %v714, %v734
        %v736 = vlaneseq
        %v737 = vshrl.u32 %v736, 7
        %v738 = vsub.s32 5, %v737
        %v739 = vrot.slane %v714, %v738
        %vm746 = vcmask 785408
        %v748 = vsel %vm746, %v641, 0
        %750 = vmatprep.subr.mxu0 0.0
        %751 = vmatpush1.msra.mxu0 0.0
        %752 = vmatprep.subr.mxu0 0.0
        %753 = vmatpush1.msra.mxu0 0.0
        %754 = vmatprep.subr.mxu0 0.0
        %755 = vmatpush1.msra.mxu0 0.0
        %756 = vmatprep.subr.mxu0 0.0
        %757 = vmatpush1.msra.mxu0 0.0
        %758 = vmatprep.subr.mxu0 %v709
        %759 = vmatpush1.msra.mxu0 %v708
        %760 = vmatprep.subr.mxu0 %v703
        %761 = vmatpush1.msra.mxu0 %v702
        %762 = vmatprep.subr.mxu0 %v697
        %763 = vmatpush1.msra.mxu0 %v696
        %764 = vmatprep.subr.mxu0 %v691
        %765 = vmatpush1.msra.mxu0 %v690
        %766 = vmatprep.subr.mxu0 %v685
        %767 = vmatpush1.msra.mxu0 %v684
        %768 = vmatprep.subr.mxu0 %v679
        %769 = vmatpush1.msra.mxu0 %v678
        %770 = vmatprep.subr.mxu0 %v673
        %771 = vmatpush1.msra.mxu0 %v672
        %772 = vmatprep.subr.mxu0 %v667
        %773 = vmatpush1.msra.mxu0 %v666
        %774 = vmatprep.subr.mxu0 %v661
        %775 = vmatpush1.msra.mxu0 %v660
        %776 = vmatprep.subr.mxu0 %v655
        %777 = vmatpush1.msra.mxu0 %v654
        %778 = vmatprep.subr.mxu0 %v649
        %779 = vmatpush1.msra.mxu0 %v648
        %780 = vmatprep.subr.mxu0 %v643
        %781 = vmatpush1.msra.mxu0 %v642
        %782 = vmatprep.subr.mxu0 0.0
        %783 = vmatpush2.msra.mxu0 0.0
        %784 = vmatprep.subr.mxu0 0.0
        %785 = vmatpush2.msra.mxu0 0.0
        %786 = vmatprep.subr.mxu0 0.0
        %787 = vmatpush2.msra.mxu0 0.0
        %788 = vmatprep.subr.mxu0 0.0
        %789 = vmatpush2.msra.mxu0 0.0
        %790 = vmatprep.subr.mxu0 0.0
        %791 = vmatpush2.msra.mxu0 0.0
        %792 = vmatprep.subr.mxu0 0.0
        %793 = vmatpush2.msra.mxu0 0.0
        %794 = vmatprep.subr.mxu0 0.0
        %795 = vmatpush2.msra.mxu0 0.0
        %796 = vmatprep.subr.mxu0 0.0
        %797 = vmatpush2.msra.mxu0 0.0
        %798 = vmatprep.subr.mxu0 0.0
        %799 = vmatpush2.msra.mxu0 0.0
        %800 = vmatprep.subr.mxu0 0.0
        %801 = vmatpush2.msra.mxu0 0.0
        %802 = vmatprep.subr.mxu0 0.0
        %803 = vmatpush2.msra.mxu0 0.0
        %804 = vmatprep.subr.mxu0 0.0
        %805 = vmatpush2.msra.mxu0 0.0
        %806 = vmatprep.subr.mxu0 0.0
        %807 = vmatpush2.msra.mxu0 0.0
        %808 = vmatprep.subr.mxu0 0.0
        %809 = vmatpush2.msra.mxu0 0.0
        %810 = vmatprep.subr.mxu0 0.0
        %811 = vmatpush2.msra.mxu0 0.0
        %812 = vmatprep.subr.mxu0 0.0
        %813 = vmatpush2.msra.mxu0 0.0
        %814 = vmatprep.mubr.f32.mxu0 0.0
        %815 = vmatmul.mubr.f32.gmra.mxu0 %v748
        %v816 = vpop.f32.mrf.mxu0
        %v817 = vadd.f32 %v719, %v816
        %v818 = vpop.f32.mrf.mxu0
        %v819 = vadd.f32 %v723, %v818
        %820 = vdwg.mxu0
        %821 = vmatprep.subr.mxu0 0.0
        %822 = vmatpush1.msra.mxu0 0.0
        %823 = vmatprep.subr.mxu0 0.0
        %824 = vmatpush1.msra.mxu0 0.0
        %825 = vmatprep.subr.mxu0 0.0
        %826 = vmatpush1.msra.mxu0 0.0
        %827 = vmatprep.subr.mxu0 0.0
        %828 = vmatpush1.msra.mxu0 0.0
        %829 = vmatprep.subr.mxu0 %v711
        %830 = vmatpush1.msra.mxu0 %v710
        %831 = vmatprep.subr.mxu0 %v705
        %832 = vmatpush1.msra.mxu0 %v704
        %833 = vmatprep.subr.mxu0 %v699
        %834 = vmatpush1.msra.mxu0 %v698
        %835 = vmatprep.subr.mxu0 %v693
        %836 = vmatpush1.msra.mxu0 %v692
        %837 = vmatprep.subr.mxu0 %v687
        %838 = vmatpush1.msra.mxu0 %v686
        %839 = vmatprep.subr.mxu0 %v681
        %840 = vmatpush1.msra.mxu0 %v680
        %841 = vmatprep.subr.mxu0 %v675
        %842 = vmatpush1.msra.mxu0 %v674
        %843 = vmatprep.subr.mxu0 %v669
        %844 = vmatpush1.msra.mxu0 %v668
        %845 = vmatprep.subr.mxu0 %v663
        %846 = vmatpush1.msra.mxu0 %v662
        %847 = vmatprep.subr.mxu0 %v657
        %848 = vmatpush1.msra.mxu0 %v656
        %849 = vmatprep.subr.mxu0 %v651
        %850 = vmatpush1.msra.mxu0 %v650
        %851 = vmatprep.subr.mxu0 %v645
        %852 = vmatpush1.msra.mxu0 %v644
        %853 = vmatprep.subr.mxu0 0.0
        %854 = vmatpush2.msra.mxu0 0.0
        %855 = vmatprep.subr.mxu0 0.0
        %856 = vmatpush2.msra.mxu0 0.0
        %857 = vmatprep.subr.mxu0 0.0
        %858 = vmatpush2.msra.mxu0 0.0
        %859 = vmatprep.subr.mxu0 0.0
        %860 = vmatpush2.msra.mxu0 0.0
        %861 = vmatprep.subr.mxu0 0.0
        %862 = vmatpush2.msra.mxu0 0.0
        %863 = vmatprep.subr.mxu0 0.0
        %864 = vmatpush2.msra.mxu0 0.0
        %865 = vmatprep.subr.mxu0 0.0
        %866 = vmatpush2.msra.mxu0 0.0
        %867 = vmatprep.subr.mxu0 0.0
        %868 = vmatpush2.msra.mxu0 0.0
        %869 = vmatprep.subr.mxu0 0.0
        %870 = vmatpush2.msra.mxu0 0.0
        %871 = vmatprep.subr.mxu0 0.0
        %872 = vmatpush2.msra.mxu0 0.0
        %873 = vmatprep.subr.mxu0 0.0
        %874 = vmatpush2.msra.mxu0 0.0
        %875 = vmatprep.subr.mxu0 0.0
        %876 = vmatpush2.msra.mxu0 0.0
        %877 = vmatprep.subr.mxu0 0.0
        %878 = vmatpush2.msra.mxu0 0.0
        %879 = vmatprep.subr.mxu0 0.0
        %880 = vmatpush2.msra.mxu0 0.0
        %881 = vmatprep.subr.mxu0 0.0
        %882 = vmatpush2.msra.mxu0 0.0
        %883 = vmatprep.subr.mxu0 0.0
        %884 = vmatpush2.msra.mxu0 0.0
        %885 = vmatprep.mubr.f32.mxu0 0.0
        %886 = vmatmul.mubr.f32.gmra.mxu0 %v748
        %v887 = vpop.f32.mrf.mxu0
        %v888 = vadd.f32 %v727, %v887
        %v889 = vpop.f32.mrf.mxu0
        %v890 = vadd.f32 %v731, %v889
        %891 = vdwg.mxu0
        %892 = vmatprep.subr.mxu0 0.0
        %893 = vmatpush1.msra.mxu0 0.0
        %894 = vmatprep.subr.mxu0 0.0
        %895 = vmatpush1.msra.mxu0 0.0
        %896 = vmatprep.subr.mxu0 0.0
        %897 = vmatpush1.msra.mxu0 0.0
        %898 = vmatprep.subr.mxu0 0.0
        %899 = vmatpush1.msra.mxu0 0.0
        %900 = vmatprep.subr.mxu0 %v713
        %901 = vmatpush1.msra.mxu0 %v712
        %902 = vmatprep.subr.mxu0 %v707
        %903 = vmatpush1.msra.mxu0 %v706
        %904 = vmatprep.subr.mxu0 %v701
        %905 = vmatpush1.msra.mxu0 %v700
        %906 = vmatprep.subr.mxu0 %v695
        %907 = vmatpush1.msra.mxu0 %v694
        %908 = vmatprep.subr.mxu0 %v689
        %909 = vmatpush1.msra.mxu0 %v688
        %910 = vmatprep.subr.mxu0 %v683
        %911 = vmatpush1.msra.mxu0 %v682
        %912 = vmatprep.subr.mxu0 %v677
        %913 = vmatpush1.msra.mxu0 %v676
        %914 = vmatprep.subr.mxu0 %v671
        %915 = vmatpush1.msra.mxu0 %v670
        %916 = vmatprep.subr.mxu0 %v665
        %917 = vmatpush1.msra.mxu0 %v664
        %918 = vmatprep.subr.mxu0 %v659
        %919 = vmatpush1.msra.mxu0 %v658
        %920 = vmatprep.subr.mxu0 %v653
        %921 = vmatpush1.msra.mxu0 %v652
        %922 = vmatprep.subr.mxu0 %v647
        %923 = vmatpush1.msra.mxu0 %v646
        %924 = vmatprep.subr.mxu0 0.0
        %925 = vmatpush2.msra.mxu0 0.0
        %926 = vmatprep.subr.mxu0 0.0
        %927 = vmatpush2.msra.mxu0 0.0
        %928 = vmatprep.subr.mxu0 0.0
        %929 = vmatpush2.msra.mxu0 0.0
        %930 = vmatprep.subr.mxu0 0.0
        %931 = vmatpush2.msra.mxu0 0.0
        %932 = vmatprep.subr.mxu0 0.0
        %933 = vmatpush2.msra.mxu0 0.0
        %934 = vmatprep.subr.mxu0 0.0
        %935 = vmatpush2.msra.mxu0 0.0
        %936 = vmatprep.subr.mxu0 0.0
        %937 = vmatpush2.msra.mxu0 0.0
        %938 = vmatprep.subr.mxu0 0.0
        %939 = vmatpush2.msra.mxu0 0.0
        %940 = vmatprep.subr.mxu0 0.0
        %941 = vmatpush2.msra.mxu0 0.0
        %942 = vmatprep.subr.mxu0 0.0
        %943 = vmatpush2.msra.mxu0 0.0
        %944 = vmatprep.subr.mxu0 0.0
        %945 = vmatpush2.msra.mxu0 0.0
        %946 = vmatprep.subr.mxu0 0.0
        %947 = vmatpush2.msra.mxu0 0.0
        %948 = vmatprep.subr.mxu0 0.0
        %949 = vmatpush2.msra.mxu0 0.0
        %950 = vmatprep.subr.mxu0 0.0
        %951 = vmatpush2.msra.mxu0 0.0
        %952 = vmatprep.subr.mxu0 0.0
        %953 = vmatpush2.msra.mxu0 0.0
        %954 = vmatprep.subr.mxu0 0.0
        %955 = vmatpush2.msra.mxu0 0.0
        %956 = vmatprep.mubr.f32.mxu0 0.0
        %957 = vmatmul.mubr.f32.gmra.mxu0 %v748
        %v958 = vpop.f32.mrf.mxu0
        %v959 = vadd.f32 %v735, %v958
        %v960 = vpop.f32.mrf.mxu0
        %v961 = vadd.f32 %v739, %v960
        %962 = vdwg.mxu0
        %v969 = vcombine.low %v817, %v819
        %v970 = vcombine.low %v888, %v890
        %v971 = vcombine.low %v959, %v961
        %v973 = vunpack.c.l.s4 1966171168
        %v974 = vunpack.c.0.s8 %v973
        %v975 = vlaneseq
        %v976 = vshrl.u32 %v975, 7
        %v977 = vsub.s32 %v974, %v976
        %v978 = vrot.slane %v969, %v977
        %v980 = vunpack.c.l.s4 1966171168
        %v981 = vunpack.c.0.s8 %v980
        %v982 = vlaneseq
        %v983 = vshrl.u32 %v982, 7
        %v984 = vsub.s32 %v981, %v983
        %v985 = vrot.slane %v970, %v984
        %v987 = vunpack.c.l.s4 1966171168
        %v988 = vunpack.c.0.s8 %v987
        %v989 = vlaneseq
        %v990 = vshrl.u32 %v989, 7
        %v991 = vsub.s32 %v988, %v990
        %v992 = vrot.slane %v971, %v991
        %v993 = vcombine.low %v978, %v985
        %v995 = vunpack.c.l.s4 1966171168
        %v996 = vunpack.c.0.s8 %v995
        %v997 = vlaneseq
        %v998 = vshrl.u32 %v997, 7
        %v999 = vsub.s32 %v996, %v998
        %v1000 = vrot.slane %v993, %v999
        %v1002 = vunpack.c.l.s4 1966171168
        %v1003 = vunpack.c.0.s8 %v1002
        %v1004 = vlaneseq
        %v1005 = vshrl.u32 %v1004, 7
        %v1006 = vsub.s32 %v1003, %v1005
        %v1007 = vrot.slane %v992, %v1006
        %v1008 = vcombine.low %v1000, %v1007
        %v1010 = vlaneseq
        %vm1011 = vcmp.ge.s32.totalorder %v1010, 0
        %vm1012 = vcmp.lt.s32.totalorder %v1010, 768
        %vm1013 = vmand %vm1011, %vm1012
        %1014 = vst.msk [vmem:[%s278] sm:$0x3f] %vm1013, %v1008
        %s1015 = sand.u32 %s142, 1
        %s1016 = scalar_lea.sflag [#allocation4], %s1015
        %s1017 = sand.u32 %s142, 1
        %s1018 = smul.addr %s1017, 6
        %s1019 = scalar_lea.vmem [#allocation10], %s1018
        // Predicated region
        $region57: #{tpu_custom_call.1} parent=39 // pred_check
          %p1020 = pneg %p152
        $region58: #{tpu_custom_call.1} parent=39 // pred_check_branch
          %1022 = sbr.rel (%p1020) target = $region60
        $region59: #{tpu_custom_call.1} parent=39 // pred_region
          %s1024 = ssub.s32 96, 96
          %1025 = vsyncadd %s1016, %s1024
          %s1026 = smul.addr %s24, 6
          %s1027 = smul.addr %s1026, 16
          %s1028 = scalar_lea.hbm %s5, %s1027
          %s1030 = sshll.u32 %s1019, 4
          %s1031 = int_to_ptr.vmem [resolvable:$true] %s1030
          %1033 = dma.vmem_to_hbm [thread:$0]  %s1031, 96, %s1028, %s1016
        $region60: #{tpu_custom_call.1} parent=39 // pred_fallthru
          _
      $region40: #{tpu_custom_call.1} parent=5 // pred_fallthru
        _
      %p1034 = scmp.le.s32.totalorder 2, %s19
      // Predicated region
      $region61: #{tpu_custom_call.1} parent=5 // pred_check
        %p1035 = pneg %p1034
      $region62: #{tpu_custom_call.1} parent=5 // pred_check_branch
        %1037 = sbr.rel (%p1035) target = $region64
      $region63: #{tpu_custom_call.1} parent=5 // pred_region
        %s1038 = ssub.s32 %s19, 2
        // Predicated region
        $region65: #{tpu_custom_call.1} parent=63 // pred_check
          %p1039 = pneg %p158
        $region66: #{tpu_custom_call.1} parent=63 // pred_check_branch
          %1041 = sbr.rel (%p1039) target = $region68
        $region67: #{tpu_custom_call.1} parent=63 // pred_region
          %s1042 = sand.u32 %s143, 1
          %s1043 = scalar_lea.sflag [#allocation4], %s1042
          %s1044 = sand.u32 %s143, 1
          %s1045 = smul.addr %s1044, 6
          %s1046 = scalar_lea.vmem [#allocation10], %s1045
          %1047 = dma.done %s1043, 96
        $region68: #{tpu_custom_call.1} parent=63 // pred_fallthru
          _
      $region64: #{tpu_custom_call.1} parent=5 // pred_fallthru
        _
    $region6: #{tpu_custom_call.1} parent=1 // loop_footer
      %s23 = sadd.s32 1, %s19
    $region7: #{tpu_custom_call.1} parent=1 // loop_footer_branch
      %18 = sbr.rel target = $region3
    $region8: #{tpu_custom_call.1} parent=1 // loop_exit
      _
    %1048 = vsyncpa [#allocation3], 1
    %s1049 = scalar_lea.sflag [#allocation3], 1
    %1050 = vsyncpa %s1049, 1
    %1051 = vsyncpa [#allocation6], 1
    %1052 = vsyncpa [#allocation9], 1
    %1053 = vsyncpa [#allocation4], 1
    %s1054 = scalar_lea.sflag [#allocation4], 1
    %1055 = vsyncpa %s1054, 1

</llo_original>
